<compile_context>
chip_gen: v6e
topology: v6e:2x2x1
jax: 0.10.0
libtpu: 0.0.40
codegen_flags: <defaults>
</compile_context>

<pallas_src>
import jax
import jax.numpy as jnp
from jax.experimental import pallas as pl
from jax.experimental.pallas import tpu as pltpu


# ---------------------------------------------------------------------------
# Pallas kernels
# ---------------------------------------------------------------------------
def _wmatmul_bias_kernel(w_ref, p_ref, b_ref, o_ref):
    """Single-K-block path: o[Cout, bm] = W[Cout, Kp] @ P[Kp, bm] + bias[Cout, 1]."""
    acc = jnp.dot(w_ref[...], p_ref[...], preferred_element_type=jnp.float32)
    o_ref[...] = (acc + b_ref[...]).astype(o_ref.dtype)


def _wmatmul_bias_acc_kernel(w_ref, p_ref, b_ref, o_ref, acc_ref):
    """K-tiled path (large Kdim): f32 VMEM accumulator over the K grid axis."""
    @pl.when(pl.program_id(1) == 0)
    def _():
        acc_ref[...] = jnp.zeros_like(acc_ref)

    acc_ref[...] += jnp.dot(w_ref[...], p_ref[...],
                            preferred_element_type=jnp.float32)

    @pl.when(pl.program_id(1) == pl.num_programs(1) - 1)
    def _():
        o_ref[...] = (acc_ref[...] + b_ref[...]).astype(o_ref.dtype)


# ---------------------------------------------------------------------------
# Matmul wrapper (transposed layout, bf16 operands, f32 accumulation)
# ---------------------------------------------------------------------------
def _round_up(v, m):
    return (v + m - 1) // m * m


def _pick_bm(M):
    # Largest M (lane) tile in {512, 256, 128} that still leaves >= 2 parallel
    # M-blocks when M allows it, so the v7x megacore can shard the grid.
    for bm in (512, 256, 128):
        if M >= 2 * bm:
            return bm
    return 128


def _conv_matmul_T(w_mat, patches_t, bias, *, single_k_max=2048, bk=512):
    """out^T = w_mat @ patches_t + bias[:, None], bf16 x bf16 -> f32 accumulate.

    w_mat:     [Cout, Kdim]  (f32; cast to bf16 here -- tiny)
    patches_t: [Kdim, M]     (bf16, lane-dense over M -- the big slab)
    bias:      [Cout]        (f32)
    returns:   [Cout, M]     f32
    """
    Cout, Kdim = w_mat.shape
    Kdim2, M = patches_t.shape
    assert Kdim == Kdim2

    bm = _pick_bm(M)
    Mp = _round_up(M, bm)
    Coutp = _round_up(Cout, 16)                 # bf16 sublane tile; tiny padding
    k_tiled = Kdim > single_k_max
    if k_tiled:
        bk = max(128, _round_up(min(bk, Kdim), 128))
        Kp = _round_up(Kdim, bk)
    else:
        Kp = _round_up(Kdim, 16)                # keep big slab lean (no 128-pad on K)

    # Small operands: explicit zero-padded copies (cheap).
    w_p = jnp.zeros((Coutp, Kp), jnp.bfloat16).at[:Cout, :Kdim].set(
        w_mat.astype(jnp.bfloat16))
    b_p = jnp.zeros((Coutp, 1), jnp.float32).at[:Cout, 0].set(
        bias.astype(jnp.float32))
    # Big slab: a single pad (often a no-op on M); under jit this fuses with the
    # upstream im2col transpose/reshape into one copy -> no second full-size pass.
    p_p = jnp.pad(patches_t.astype(jnp.bfloat16),
                  ((0, Kp - Kdim), (0, Mp - M)))

    n_m = Mp // bm
    cost = pl.CostEstimate(                      # true work, not padded dims
        flops=2 * Cout * Kdim * M,
        transcendentals=0,
        bytes_accessed=2 * Cout * Kdim + 2 * Kdim * M + 4 * Cout * M,
    )

    if not k_tiled:
        out = pl.pallas_call(
            _wmatmul_bias_kernel,
            out_shape=jax.ShapeDtypeStruct((Coutp, Mp), jnp.float32),
            grid_spec=pltpu.PrefetchScalarGridSpec(
                num_scalar_prefetch=0,
                grid=(n_m,),
                in_specs=[
                    pl.BlockSpec((Coutp, Kp), lambda i: (0, 0)),   # weights (resident)
                    pl.BlockSpec((Kp, bm), lambda i: (0, i)),      # patches^T tile
                    pl.BlockSpec((Coutp, 1), lambda i: (0, 0)),    # bias
                ],
                out_specs=pl.BlockSpec((Coutp, bm), lambda i: (0, i)),
            ),
            compiler_params=pltpu.CompilerParams(
                dimension_semantics=("parallel",)),
            cost_estimate=cost,
        )(w_p, p_p, b_p)
    else:
        n_k = Kp // bk
        out = pl.pallas_call(
            _wmatmul_bias_acc_kernel,
            out_shape=jax.ShapeDtypeStruct((Coutp, Mp), jnp.float32),
            grid_spec=pltpu.PrefetchScalarGridSpec(
                num_scalar_prefetch=0,
                grid=(n_m, n_k),
                in_specs=[
                    pl.BlockSpec((Coutp, bk), lambda i, k: (0, k)),
                    pl.BlockSpec((bk, bm), lambda i, k: (k, i)),
                    pl.BlockSpec((Coutp, 1), lambda i, k: (0, 0)),
                ],
                out_specs=pl.BlockSpec((Coutp, bm), lambda i, k: (0, i)),
                scratch_shapes=[pltpu.VMEM((Coutp, bm), jnp.float32)],
            ),
            compiler_params=pltpu.CompilerParams(
                dimension_semantics=("parallel", "arbitrary")),
            cost_estimate=cost,
        )(w_p, p_p, b_p)

    return out[:Cout, :M]


# ---------------------------------------------------------------------------
# EquivariantConv2d forward
# ---------------------------------------------------------------------------
def make_w0(n, m, g, K, dtype=jnp.float32):
    """Fixed equivariant basis W0, exactly as in the PyTorch constructor."""
    k_total = m * K * K
    a = (g * jnp.arange(k_total)) // k_total
    b = (g * jnp.arange(n)) // n
    W0 = (a[None, :] == b[:, None]).astype(dtype) * (g / k_total)
    return W0.reshape(n, m, K, K)


def equivariant_conv2d(x, weight, W0, bias, *, stride=1, padding=0, dilation=1,
                       single_k_max=2048, bk=512):
    """x: [N, C_in, H, W]; weight: [C_out, groups, C_in*K*K//groups];
    W0: [C_out, C_in, K, K]; bias: [C_out] or None."""
    n = weight.shape[0]
    _, m, K, _ = W0.shape

    # --- weight correction (tiny, f32, plain JAX) ---------------------------
    Wc = weight - jnp.mean(weight, axis=2, keepdims=True)
    Wc = Wc.reshape(n, m, K, K) + W0                          # [Cout, C, K, K]

    # --- replication padding (ReplicationPad2d) -----------------------------
    xp = jnp.pad(x, ((0, 0), (0, 0), (padding, padding), (padding, padding)),
                 mode='edge')
    N, C, Hp, Wp = xp.shape
    eff = (K - 1) * dilation + 1
    Ho = (Hp - eff) // stride + 1
    Wo = (Wp - eff) // stride + 1
    Kdim = C * K * K
    M = N * Ho * Wo

    # --- transposed im2col: [Kdim, M], K-index order (c, kh, kw) ------------
    # Cast to bf16 *before* the big copy so the materialized slab is half-width;
    # under jit the stack/transpose/reshape (+pad in _conv_matmul_T) fuse into a
    # single copy producing the lane-dense [Kp, Mp] slab.
    # TODO(synk): fuse replication-pad + im2col into the kernel via manual DMA
    # row gather once the K^2-expanded activation HBM traffic dominates.
    xp16 = xp.astype(jnp.bfloat16)
    cols = []
    for kh in range(K):
        for kw in range(K):
            h0, w0 = kh * dilation, kw * dilation
            cols.append(xp16[:, :,
                             h0:h0 + (Ho - 1) * stride + 1:stride,
                             w0:w0 + (Wo - 1) * stride + 1:stride])
    patches = jnp.stack(cols, axis=2)                         # [N, C, K*K, Ho, Wo]
    patches_t = patches.transpose(1, 2, 0, 3, 4).reshape(Kdim, M)

    w_mat = Wc.reshape(n, Kdim)                               # [Cout, Kdim] f32
    b_vec = bias if bias is not None else jnp.zeros((n,), jnp.float32)

    out_t = _conv_matmul_T(w_mat, patches_t, b_vec,
                           single_k_max=single_k_max, bk=bk)  # [Cout, M] f32
    y = out_t.reshape(n, N, Ho, Wo).transpose(1, 0, 2, 3)     # -> NCHW
    return y.astype(x.dtype)


# ---------------------------------------------------------------------------
# Pure-JAX reference (mirrors the PyTorch forward); compute_dtype=bf16 gives the
# bf16-operand / f32-accumulation reference matching the kernel's math.
# ---------------------------------------------------------------------------
def equivariant_conv2d_ref(x, weight, W0, bias, *, stride=1, padding=0,
                           dilation=1, compute_dtype=jnp.float32):
    n = weight.shape[0]
    _, m, K, _ = W0.shape
    Wc = weight - jnp.mean(weight, axis=2, keepdims=True)
    Wc = Wc.reshape(n, m, K, K) + W0
    xp = jnp.pad(x, ((0, 0), (0, 0), (padding, padding), (padding, padding)),
                 mode='edge')
    y = jax.lax.conv_general_dilated(
        xp.astype(compute_dtype), Wc.astype(compute_dtype),
        window_strides=(stride, stride), padding='VALID',
        rhs_dilation=(dilation, dilation),
        dimension_numbers=('NCHW', 'OIHW', 'NCHW'),
        preferred_element_type=jnp.float32)
    if bias is not None:
        y = y + bias[None, :, None, None].astype(jnp.float32)
    return y.astype(x.dtype)


# ---------------------------------------------------------------------------
# Self-test
# ---------------------------------------------------------------------------
if __name__ == "__main__":
    def run_case(name, *, N, C_in, H, W, C_out, groups, K,
                 stride, padding, dilation, single_k_max, bk, key):
        assert C_in % groups == 0 and C_out % groups == 0
        k_total = C_in * K * K
        k1, k2, k3 = jax.random.split(key, 3)
        x = jax.random.normal(k1, (N, C_in, H, W), dtype=jnp.float32)
        limit = (6.0 / (k_total // groups + C_out)) ** 0.5
        weight = jax.random.uniform(k2, (C_out, groups, k_total // groups),
                                    minval=-limit, maxval=limit,
                                    dtype=jnp.float32)
        # PyTorch inits bias to zeros; use a nonzero bias to exercise the fused add.
        bias = 0.1 * jax.random.normal(k3, (C_out,), dtype=jnp.float32)
        W0 = make_w0(C_out, C_in, groups, K)

        fwd = jax.jit(equivariant_conv2d,
                      static_argnames=("stride", "padding", "dilation",
                                       "single_k_max", "bk"))
        out = fwd(x, weight, W0, bias, stride=stride, padding=padding,
                  dilation=dilation, single_k_max=single_k_max, bk=bk)
        out = jax.block_until_ready(out)

        ref32 = equivariant_conv2d_ref(x, weight, W0, bias, stride=stride,
                                       padding=padding, dilation=dilation)
        ref16 = equivariant_conv2d_ref(x, weight, W0, bias, stride=stride,
                                       padding=padding, dilation=dilation,
                                       compute_dtype=jnp.bfloat16)
        assert out.shape == ref32.shape and out.dtype == ref32.dtype, name
        # Tight check vs bf16-operand / f32-accumulation reference (same math).
        assert jnp.allclose(out, ref16, atol=2e-3, rtol=2e-3), name
        # Loose sanity check vs the full-f32 reference (bf16 operand rounding).
        assert jnp.allclose(out, ref32, atol=5e-2, rtol=5e-2), name

    key = jax.random.PRNGKey(0)
    kA, kB = jax.random.split(key)

    # Case 1: single-K-block fast path (no K grid axis / accumulator),
    # 2 parallel M blocks (megacore-friendly).
    run_case("single_k", N=2, C_in=4, H=16, W=16, C_out=8, groups=2, K=3,
             stride=1, padding=1, dilation=1, single_k_max=2048, bk=512, key=kA)

    # Case 2: forces the K-tiled accumulator path (2 K-steps), strided + dilated,
    # exercising M padding / slicing as well.
    run_case("k_tiled", N=1, C_in=16, H=9, W=9, C_out=8, groups=4, K=3,
             stride=2, padding=2, dilation=2, single_k_max=0, bk=128, key=kB)

    print("KERNEL_OK")
</pallas_src>

<mosaic_0001>
module attributes {stable_mosaic.version = 11 : i64} {
  func.func @_wmatmul_bias_kernel(%arg0: i32, %arg1: memref<16x48xbf16, #tpu.memory_space<vmem>>, %arg2: memref<48x256xbf16, #tpu.memory_space<vmem>>, %arg3: memref<16x1xf32, #tpu.memory_space<vmem>>, %arg4: memref<16x256xf32, #tpu.memory_space<vmem>>) attributes {dimension_semantics = [#tpu.dimension_semantics<parallel>], iteration_bounds = array<i64: 2>, scalar_prefetch = 0 : i64, scratch_operands = 0 : i64, tpu.core_type = #tpu.core_type<tc>, window_params = [{pipeline_mode = #tpu.pipeline_mode<synchronous>, transform_indices = @transform_0, window_bounds = array<i64: 16, 48>}, {transform_indices = @transform_1, window_bounds = array<i64: 48, 256>}, {pipeline_mode = #tpu.pipeline_mode<synchronous>, transform_indices = @transform_2, window_bounds = array<i64: 16, 1>}, {transform_indices = @transform_3, window_bounds = array<i64: 16, 256>}]} {
    %c0 = arith.constant 0 : index
    %c0_0 = arith.constant 0 : index
    %0 = vector.load %arg1[%c0, %c0_0] : memref<16x48xbf16, #tpu.memory_space<vmem>>, vector<16x48xbf16>
    %c0_1 = arith.constant 0 : index
    %c0_2 = arith.constant 0 : index
    %1 = vector.load %arg2[%c0_1, %c0_2] : memref<48x256xbf16, #tpu.memory_space<vmem>>, vector<48x256xbf16>
    %cst = arith.constant dense<0.000000e+00> : vector<16x256xf32>
    %2 = tpu.matmul %0, %1, %cst {dimension_numbers = #tpu.dot_dimension_numbers<[1], [0], [0], [1], [0, 0, 1, 1], [], []>} : vector<16x48xbf16>, vector<48x256xbf16>, vector<16x256xf32> -> vector<16x256xf32>
    %c0_3 = arith.constant 0 : index
    %c0_4 = arith.constant 0 : index
    %3 = vector.load %arg3[%c0_3, %c0_4] : memref<16x1xf32, #tpu.memory_space<vmem>>, vector<16x1xf32>
    %4 = vector.broadcast %3 : vector<16x1xf32> to vector<16x256xf32>
    %5 = arith.addf %2, %4 : vector<16x256xf32>
    %c0_5 = arith.constant 0 : index
    %c0_6 = arith.constant 0 : index
    %6 = vector.load %arg4[%c0_5, %c0_6] : memref<16x256xf32, #tpu.memory_space<vmem>>, vector<16x256xf32>
    tpu.vector_store %arg4[%c0_5, %c0_6], %5 {strides = array<i32>} : memref<16x256xf32, #tpu.memory_space<vmem>>, vector<16x256xf32>,
    return
  }
  func.func @transform_0(%arg0: i32) -> (i32, i32) {
    %c0_i32 = arith.constant 0 : i32
    %c0_i32_0 = arith.constant 0 : i32
    %c0_i32_1 = arith.constant 0 : i32
    return %c0_i32, %c0_i32_0 : i32, i32
  }
  func.func @transform_1(%arg0: i32) -> (i32, i32) {
    %c0_i32 = arith.constant 0 : i32
    %c0_i32_0 = arith.constant 0 : i32
    return %c0_i32, %arg0 : i32, i32
  }
  func.func @transform_2(%arg0: i32) -> (i32, i32) {
    %c0_i32 = arith.constant 0 : i32
    %c0_i32_0 = arith.constant 0 : i32
    %c0_i32_1 = arith.constant 0 : i32
    return %c0_i32, %c0_i32_0 : i32, i32
  }
  func.func @transform_3(%arg0: i32) -> (i32, i32) {
    %c0_i32 = arith.constant 0 : i32
    %c0_i32_0 = arith.constant 0 : i32
    return %c0_i32, %arg0 : i32, i32
  }
}

</mosaic_0001>

<llo_original>
// kernel: equivariant_conv2d.1
$region0: #{equivariant_conv2d.1}
  #allocation0 [shape = 'u32[]', space=smem, size = 0x4, offset = 0x4, fixed_abs, tag = 'smem constant byte address 0x4 - core index']
  #allocation1 [shape = 'u32[144,128]{1,0:T(1,128)}', space=vmem, size = 0x12000, scoped, tag = 'internal scratch']
  %s0 = inlined_call_operand.vmem [shape: bf16[16,48], index: 0, kind: input, shape index: {}]
  %s1 = inlined_call_operand.vmem [shape: bf16[48,512], index: 1, kind: input, shape index: {}]
  %s2 = inlined_call_operand.vmem [shape: f32[16,1], index: 2, kind: input, shape index: {}]
  %s3 = inlined_call_operand.vmem [shape: f32[16,512], index: 3, kind: output, shape index: {}]
  %s4 = sld [smem:[#allocation0]]
  $region102: #{equivariant_conv2d.1} parent=0
    _
  %s6 = ssub.s32 1, %s4
  %s7 = scalar_select 0, %s6, %s4
  $region1: #{equivariant_conv2d.1} parent=0
    #allocation2 [shape = 'u8[49152]{0}', space=vmem, size = 0xc000, scoped, tag = 'input window, operand 1']
    #allocation3 [shape = 'u8[32768]{0}', space=vmem, size = 0x8000, scoped, tag = 'output window, operand 0']
    loop: start=0, step=1, limit=4
    $region2: #{equivariant_conv2d.1} parent=1 // loop_pre_header
      _
    $region3: #{equivariant_conv2d.1} parent=1 // loop_header
      %s9 = sphi 0, %s13
      %p10 = scmp.ge.s32.totalorder %s9, 4
      %s17 = sphi 0, %s17
      %s19 = sphi 0, %s17
      %s20 = sphi 0, %s19
      %s34 = sphi 0, %s20
      %s40 = sphi 0, %s42
      %s43 = sphi 0, %s40
      %s44 = sphi 0, %s43
      %s60 = sphi 0, %s44
      %s64 = sphi 0, %s64
      %s66 = sphi 0, %s64
      %s67 = sphi 0, %s66
      %s81 = sphi 0, %s67
      %s87 = sphi 0, %s89
      %s90 = sphi 0, %s87
      %s91 = sphi 0, %s90
      %s107 = sphi 0, %s91
    $region4: #{equivariant_conv2d.1} parent=1 // loop_header_branch
      %12 = sbr.rel (%p10) target = $region8
    $region5: #{equivariant_conv2d.1} parent=1 // loop_body
      %s14 = ssub.s32 %s9, 1
      %s15 = ssub.s32 %s9, 2
      %s16 = sadd.s32 %s9, 1
      %s18 = sadd.s32 %s17, 1
      %p21 = scmp.eq.s32.totalorder %s9, 1
      %p22 = scmp.ne.s32.totalorder %s17, %s19
      %p23 = scmp.eq.s32.totalorder %s9, 0
      %p24 = por %p22, %p23
      %p25 = scmp.ne.s32.totalorder %s17, %s19
      %p26 = scmp.eq.s32.totalorder %s14, 1
      %p27 = por %p25, %p26
      %p28 = scmp.ne.s32.totalorder %s19, %s20
      %p29 = scmp.eq.s32.totalorder %s14, 0
      %p30 = por %p28, %p29
      %p31 = scmp.ne.s32.totalorder %s19, %s20
      %p32 = scmp.eq.s32.totalorder %s15, 1
      %p33 = por %p31, %p32
      %p35 = scmp.ne.s32.totalorder %s20, %s34
      %p36 = scmp.eq.s32.totalorder %s15, 0
      %p37 = por %p35, %p36
      %s38 = ssub.s32 %s9, %s16
      %p39 = scmp.eq.s32.totalorder %s38, 0
      %s41 = sadd.s32 %s40, 1
      %s42 = scalar_select %p39, %s40, %s41
      %p45 = pneg %p39
      %p46 = scmp.eq.s32.totalorder %s9, 1
      %p47 = por %p45, %p46
      %p48 = scmp.ne.s32.totalorder %s40, %s43
      %p49 = scmp.eq.s32.totalorder %s9, 0
      %p50 = por %p48, %p49
      %p51 = scmp.ne.s32.totalorder %s40, %s43
      %p52 = scmp.eq.s32.totalorder %s14, 1
      %p53 = por %p51, %p52
      %p54 = scmp.ne.s32.totalorder %s43, %s44
      %p55 = scmp.eq.s32.totalorder %s14, 0
      %p56 = por %p54, %p55
      %p57 = scmp.ne.s32.totalorder %s43, %s44
      %p58 = scmp.eq.s32.totalorder %s15, 1
      %p59 = por %p57, %p58
      %p61 = scmp.ne.s32.totalorder %s44, %s60
      %p62 = scmp.eq.s32.totalorder %s15, 0
      %p63 = por %p61, %p62
      %s65 = sadd.s32 %s64, 1
      %p68 = scmp.eq.s32.totalorder %s9, 1
      %p69 = scmp.ne.s32.totalorder %s64, %s66
      %p70 = scmp.eq.s32.totalorder %s9, 0
      %p71 = por %p69, %p70
      %p72 = scmp.ne.s32.totalorder %s64, %s66
      %p73 = scmp.eq.s32.totalorder %s14, 1
      %p74 = por %p72, %p73
      %p75 = scmp.ne.s32.totalorder %s66, %s67
      %p76 = scmp.eq.s32.totalorder %s14, 0
      %p77 = por %p75, %p76
      %p78 = scmp.ne.s32.totalorder %s66, %s67
      %p79 = scmp.eq.s32.totalorder %s15, 1
      %p80 = por %p78, %p79
      %p82 = scmp.ne.s32.totalorder %s67, %s81
      %p83 = scmp.eq.s32.totalorder %s15, 0
      %p84 = por %p82, %p83
      %s85 = ssub.s32 %s9, %s16
      %p86 = scmp.eq.s32.totalorder %s85, 0
      %s88 = sadd.s32 %s87, 1
      %s89 = scalar_select %p86, %s87, %s88
      %p92 = pneg %p86
      %p93 = scmp.eq.s32.totalorder %s9, 1
      %p94 = por %p92, %p93
      %p95 = scmp.ne.s32.totalorder %s87, %s90
      %p96 = scmp.eq.s32.totalorder %s9, 0
      %p97 = por %p95, %p96
      %p98 = scmp.ne.s32.totalorder %s87, %s90
      %p99 = scmp.eq.s32.totalorder %s14, 1
      %p100 = por %p98, %p99
      %p101 = scmp.ne.s32.totalorder %s90, %s91
      %p102 = scmp.eq.s32.totalorder %s14, 0
      %p103 = por %p101, %p102
      %p104 = scmp.ne.s32.totalorder %s90, %s91
      %p105 = scmp.eq.s32.totalorder %s15, 1
      %p106 = por %p104, %p105
      %p108 = scmp.ne.s32.totalorder %s91, %s107
      %p109 = scmp.eq.s32.totalorder %s15, 0
      %p110 = por %p108, %p109
      %p111 = scmp.le.s32.totalorder 1, %s9
      %p112 = scmp.lt.s32.totalorder %s9, 3
      %p113 = pnand %p111, %p112
      %p114 = pneg %p113
      // Predicated region
      $region9: #{equivariant_conv2d.1} parent=5 // pred_check
        _
      $region10: #{equivariant_conv2d.1} parent=5 // pred_check_branch
        %116 = sbr.rel (%p113) target = $region12
      $region11: #{equivariant_conv2d.1} parent=5 // pred_region
        %s117 = ssub.s32 %s9, 1
        // Predicated region
        $region13: #{equivariant_conv2d.1} parent=11 // pred_check
          %p118 = pneg %p30
        $region14: #{equivariant_conv2d.1} parent=11 // pred_check_branch
          %120 = sbr.rel (%p118) target = $region16
        $region15: #{equivariant_conv2d.1} parent=11 // pred_region
          _
        $region16: #{equivariant_conv2d.1} parent=11 // pred_fallthru
          _
        // Predicated region
        $region17: #{equivariant_conv2d.1} parent=11 // pred_check
          %p121 = pneg %p77
        $region18: #{equivariant_conv2d.1} parent=11 // pred_check_branch
          %123 = sbr.rel (%p121) target = $region20
        $region19: #{equivariant_conv2d.1} parent=11 // pred_region
          _
        $region20: #{equivariant_conv2d.1} parent=11 // pred_fallthru
          _
      $region12: #{equivariant_conv2d.1} parent=5 // pred_fallthru
        _
      %p124 = scmp.lt.s32.totalorder %s9, 2
      // Predicated region
      $region21: #{equivariant_conv2d.1} parent=5 // pred_check
        %p125 = pneg %p124
      $region22: #{equivariant_conv2d.1} parent=5 // pred_check_branch
        %127 = sbr.rel (%p125) target = $region24
      $region23: #{equivariant_conv2d.1} parent=5 // pred_region
        // Predicated region
        $region25: #{equivariant_conv2d.1} parent=23 // pred_check
          %p128 = pneg %p50
        $region26: #{equivariant_conv2d.1} parent=23 // pred_check_branch
          %130 = sbr.rel (%p128) target = $region28
        $region27: #{equivariant_conv2d.1} parent=23 // pred_region
          %s131 = sand.u32 %s40, 1
          %s132 = sand.u32 %s40, 1
          %s133 = smul.addr %s132, 48
          %s134 = scalar_lea.vmem [#allocation2], %s133
          %s135 = smul.u32 2, %s9
          %s136 = smul.addr %s135, 4
          %s137 = scalar_lea.vmem %s1, %s136
          // Predicated region
          $region29: #{equivariant_conv2d.1} parent=27 // pred_check
            _
          $region30: #{equivariant_conv2d.1} parent=27 // pred_check_branch
            %139 = sbr.rel (0) target = $region32
          $region31: #{equivariant_conv2d.1} parent=27 // pred_region
            // Predicated region
            $region33: #{equivariant_conv2d.1} parent=31 // pred_check
              _
            $region34: #{equivariant_conv2d.1} parent=31 // pred_check_branch
              %141 = sbr.rel (0) target = $region36
            $region35: #{equivariant_conv2d.1} parent=31 // pred_region
              // Predicated region
              $region48: #{equivariant_conv2d.1} parent=35 // pred_check
                _
              $region49: #{equivariant_conv2d.1} parent=35 // pred_check_branch
                %167 = sbr.rel (0) target = $region51
              $region50: #{equivariant_conv2d.1} parent=35 // pred_region
                loop: start=0, step=1, limit=1
                $region52: #{equivariant_conv2d.1} parent=50 // loop_pre_header
                  _
                $region53: #{equivariant_conv2d.1} parent=50 // loop_header
                  %s169 = sphi 0, %s173
                  %p170 = scmp.ge.s32.totalorder %s169, 1
                  %s174 = sphi %s137, %s137
                  %s175 = sphi %s134, %s134
                $region54: #{equivariant_conv2d.1} parent=50 // loop_header_branch
                  %172 = sbr.rel (%p170) target = $region58
                $region55: #{equivariant_conv2d.1} parent=50 // loop_body
                  %v176 = vld [vmem:[%s174] sm:$0xff]
                  %177 = vst [vmem:[%s175] sm:$0xff] %v176
                  %v178 = vld [vmem:[%s174 + $0x10] sm:$0xff]
                  %179 = vst [vmem:[%s175 + $0x8] sm:$0xff] %v178
                  %v180 = vld [vmem:[%s174 + $0x20] sm:$0xff]
                  %181 = vst [vmem:[%s175 + $0x10] sm:$0xff] %v180
                  %v182 = vld [vmem:[%s174 + $0x30] sm:$0xff]
                  %183 = vst [vmem:[%s175 + $0x18] sm:$0xff] %v182
                  %v184 = vld [vmem:[%s174 + $0x40] sm:$0xff]
                  %185 = vst [vmem:[%s175 + $0x20] sm:$0xff] %v184
                  %v186 = vld [vmem:[%s174 + $0x50] sm:$0xff]
                  %187 = vst [vmem:[%s175 + $0x28] sm:$0xff] %v186
                $region56: #{equivariant_conv2d.1} parent=50 // loop_footer
                  %s173 = sadd.s32 1, %s169
                $region57: #{equivariant_conv2d.1} parent=50 // loop_footer_branch
                  %168 = sbr.rel target = $region53
                $region58: #{equivariant_conv2d.1} parent=50 // loop_exit
                  _
              $region51: #{equivariant_conv2d.1} parent=35 // pred_fallthru
                _
              // Predicated region
              $region59: #{equivariant_conv2d.1} parent=35 // pred_check
                _
              $region60: #{equivariant_conv2d.1} parent=35 // pred_check_branch
                %189 = sbr.rel target = $region62
              $region61: #{equivariant_conv2d.1} parent=35 // pred_region
                _
              $region62: #{equivariant_conv2d.1} parent=35 // pred_fallthru
                _
            $region36: #{equivariant_conv2d.1} parent=31 // pred_fallthru
              _
            // Predicated region
            $region37: #{equivariant_conv2d.1} parent=31 // pred_check
              _
            $region38: #{equivariant_conv2d.1} parent=31 // pred_check_branch
              %143 = sbr.rel target = $region40
            $region39: #{equivariant_conv2d.1} parent=31 // pred_region
              %s145 = ssub.s32 256, 1
              loop: start=0, step=1, limit=1
              $region41: #{equivariant_conv2d.1} parent=39 // loop_pre_header
                _
              $region42: #{equivariant_conv2d.1} parent=39 // loop_header
                %s147 = sphi 0, %s151
                %p148 = scmp.ge.s32.totalorder %s147, 1
                %s152 = sphi %s137, %s137
                %s153 = sphi %s134, %s134
              $region43: #{equivariant_conv2d.1} parent=39 // loop_header_branch
                %150 = sbr.rel (%p148) target = $region47
              $region44: #{equivariant_conv2d.1} parent=39 // loop_body
                %v154 = vld [vmem:[%s152] sm:%s145]
                %155 = vst [vmem:[%s153] sm:%s145] %v154
                %v156 = vld [vmem:[%s152 + $0x10] sm:%s145]
                %157 = vst [vmem:[%s153 + $0x8] sm:%s145] %v156
                %v158 = vld [vmem:[%s152 + $0x20] sm:%s145]
                %159 = vst [vmem:[%s153 + $0x10] sm:%s145] %v158
                %v160 = vld [vmem:[%s152 + $0x30] sm:%s145]
                %161 = vst [vmem:[%s153 + $0x18] sm:%s145] %v160
                %v162 = vld [vmem:[%s152 + $0x40] sm:%s145]
                %163 = vst [vmem:[%s153 + $0x20] sm:%s145] %v162
                %v164 = vld [vmem:[%s152 + $0x50] sm:%s145]
                %165 = vst [vmem:[%s153 + $0x28] sm:%s145] %v164
              $region45: #{equivariant_conv2d.1} parent=39 // loop_footer
                %s151 = sadd.s32 1, %s147
              $region46: #{equivariant_conv2d.1} parent=39 // loop_footer_branch
                %146 = sbr.rel target = $region42
              $region47: #{equivariant_conv2d.1} parent=39 // loop_exit
                _
            $region40: #{equivariant_conv2d.1} parent=31 // pred_fallthru
              _
          $region32: #{equivariant_conv2d.1} parent=27 // pred_fallthru
            _
          %190 = vnop
        $region28: #{equivariant_conv2d.1} parent=23 // pred_fallthru
          _
      $region24: #{equivariant_conv2d.1} parent=5 // pred_fallthru
        _
      %p191 = scmp.le.s32.totalorder 1, %s9
      %p192 = scmp.lt.s32.totalorder %s9, 3
      %p193 = pnand %p191, %p192
      %p194 = pneg %p193
      // Predicated region
      $region63: #{equivariant_conv2d.1} parent=5 // pred_check
        _
      $region64: #{equivariant_conv2d.1} parent=5 // pred_check_branch
        %196 = sbr.rel (%p193) target = $region66
      $region65: #{equivariant_conv2d.1} parent=5 // pred_region
        %s197 = ssub.s32 %s9, 1
        %s198 = sand.u32 %s43, 1
        %s199 = sand.u32 %s43, 1
        %s200 = smul.addr %s199, 48
        %s201 = scalar_lea.vmem [#allocation2], %s200
        // Predicated region
        $region67: #{equivariant_conv2d.1} parent=65 // pred_check
          %p202 = pneg %p56
        $region68: #{equivariant_conv2d.1} parent=65 // pred_check_branch
          %204 = sbr.rel (%p202) target = $region70
        $region69: #{equivariant_conv2d.1} parent=65 // pred_region
          _
        $region70: #{equivariant_conv2d.1} parent=65 // pred_fallthru
          _
        %p205 = pneg %p30
        %p206 = pneg %p27
        %s207 = sand.u32 %s43, 1
        %s208 = sand.u32 %s43, 1
        %s209 = smul.addr %s208, 48
        %s210 = scalar_lea.vmem [#allocation2], %s209
        %p211 = pneg %p56
        %p212 = pneg %p53
        %p213 = pneg %p77
        %p214 = pneg %p74
        %p215 = pneg %p103
        %p216 = pneg %p100
        %s217 = sand.u32 %s90, 1
        %s218 = sand.u32 %s90, 1
        %s219 = smul.addr %s218, 32
        %s220 = scalar_lea.vmem [#allocation3], %s219
        %s221 = smul.u32 2, %s14
        %s222 = smul.u32 2, %s14
        %v224 = vld [vmem:[%s0] sm:$0xf]
        %v225 = vld [vmem:[%s0 + $0x4] sm:$0xf]
        %v226 = vld [vmem:[%s201] sm:$0xff]
        %v227 = vld [vmem:[%s201 + $0x8] sm:$0xff]
        %v228 = vld [vmem:[%s201 + $0x10] sm:$0xff]
        %v229 = vld [vmem:[%s201 + $0x18] sm:$0xff]
        %v230 = vld [vmem:[%s201 + $0x20] sm:$0xff]
        %v231 = vld [vmem:[%s201 + $0x28] sm:$0xff]
        %v232 = vld [vmem:[%s2] sm:$0xff]
        %v233 = vld [vmem:[%s2 + $0x8] sm:$0xff]
        %235 = vset.pattern.permute.xlu0 0
        %236 = vperm.xlu0 %235, %v232
        %v237 = vpop.permute.xlu0 %236
        %240 = vset.pattern.permute.xlu0 0
        %241 = vperm.xlu0 %240, %v233
        %v242 = vpop.permute.xlu0 %241
        %v246 = vunpack.c.l.b16 %v224
        %v247 = vunpack.c.l.b16 %v225
        %v248 = vpack.c.b16 %v247, %v246
        %v255 = vunpack.c.l.b16 %v226
        %v256 = vunpack.c.h.b16 %v226
        %v257 = vunpack.c.l.b16 %v227
        %v258 = vunpack.c.h.b16 %v227
        %v259 = vunpack.c.l.b16 %v228
        %v260 = vunpack.c.h.b16 %v228
        %v261 = vunpack.c.l.b16 %v229
        %v262 = vunpack.c.h.b16 %v229
        %v263 = vunpack.c.l.b16 %v230
        %v264 = vunpack.c.h.b16 %v230
        %v265 = vunpack.c.l.b16 %v231
        %v266 = vunpack.c.h.b16 %v231
        %v267 = vpack.c.b16 %v257, %v255
        %v268 = vpack.c.b16 %v258, %v256
        %v269 = vpack.c.b16 %v261, %v259
        %v270 = vpack.c.b16 %v262, %v260
        %v271 = vpack.c.b16 %v265, %v263
        %v272 = vpack.c.b16 %v266, %v264
        %vm279 = vcmask 392192
        %v281 = vsel %vm279, %v248, 0
        %283 = vmatprep.subr.bf16.mxu0 0
        %284 = vmatpush1.bf16.msra.mxu0 0
        %285 = vmatprep.subr.bf16.mxu0 0
        %286 = vmatpush1.bf16.msra.mxu0 0
        %287 = vmatprep.subr.bf16.mxu0 0
        %288 = vmatpush1.bf16.msra.mxu0 0
        %289 = vmatprep.subr.bf16.mxu0 0
        %290 = vmatpush1.bf16.msra.mxu0 0
        %291 = vmatprep.subr.bf16.mxu0 0
        %292 = vmatpush1.bf16.msra.mxu0 0
        %293 = vmatprep.subr.bf16.mxu0 %v272
        %294 = vmatpush1.bf16.msra.mxu0 %v271
        %295 = vmatprep.subr.bf16.mxu0 %v270
        %296 = vmatpush1.bf16.msra.mxu0 %v269
        %297 = vmatprep.subr.bf16.mxu0 %v268
        %298 = vmatpush1.bf16.msra.mxu0 %v267
        %299 = vmatprep.subr.bf16.mxu0 0
        %300 = vmatpush2.bf16.msra.mxu0 0
        %301 = vmatprep.subr.bf16.mxu0 0
        %302 = vmatpush2.bf16.msra.mxu0 0
        %303 = vmatprep.subr.bf16.mxu0 0
        %304 = vmatpush2.bf16.msra.mxu0 0
        %305 = vmatprep.subr.bf16.mxu0 0
        %306 = vmatpush2.bf16.msra.mxu0 0
        %307 = vmatprep.subr.bf16.mxu0 0
        %308 = vmatpush2.bf16.msra.mxu0 0
        %309 = vmatprep.subr.bf16.mxu0 0
        %310 = vmatpush2.bf16.msra.mxu0 0
        %311 = vmatprep.subr.bf16.mxu0 0
        %312 = vmatpush2.bf16.msra.mxu0 0
        %313 = vmatprep.subr.bf16.mxu0 0
        %314 = vmatpush2.bf16.msra.mxu0 0
        %315 = vmatprep.mubr.bf16.mxu0 0
        %316 = vmatmul.mubr.bf16.gmra.mxu0 %v281
        %v317 = vpop.f32.mrf.mxu0
        %v318 = vadd.f32 %v237, %v317
        %v319 = vpop.f32.mrf.mxu0
        %v320 = vadd.f32 %v237, %v319
        %v321 = vpop.f32.mrf.mxu0
        %v322 = vadd.f32 %v242, %v321
        %v323 = vpop.f32.mrf.mxu0
        %v324 = vadd.f32 %v242, %v323
        %325 = vdwg.mxu0
        %326 = vst [vmem:[%s220] sm:$0xff] %v318
        %327 = vst [vmem:[%s220 + $0x8] sm:$0xff] %v320
        %328 = vst [vmem:[%s220 + $0x10] sm:$0xff] %v322
        %329 = vst [vmem:[%s220 + $0x18] sm:$0xff] %v324
        %s330 = sand.u32 %s90, 1
        %s331 = sand.u32 %s90, 1
        %s332 = smul.addr %s331, 32
        %s333 = scalar_lea.vmem [#allocation3], %s332
        // Predicated region
        $region71: #{equivariant_conv2d.1} parent=65 // pred_check
          %p334 = pneg %p100
        $region72: #{equivariant_conv2d.1} parent=65 // pred_check_branch
          %336 = sbr.rel (%p334) target = $region74
        $region73: #{equivariant_conv2d.1} parent=65 // pred_region
          %s337 = smul.u32 2, %s14
          %s338 = smul.addr %s337, 8
          %s339 = scalar_lea.vmem %s3, %s338
          // Predicated region
          $region75: #{equivariant_conv2d.1} parent=73 // pred_check
            _
          $region76: #{equivariant_conv2d.1} parent=73 // pred_check_branch
            %341 = sbr.rel (0) target = $region78
          $region77: #{equivariant_conv2d.1} parent=73 // pred_region
            // Predicated region
            $region79: #{equivariant_conv2d.1} parent=77 // pred_check
              _
            $region80: #{equivariant_conv2d.1} parent=77 // pred_check_branch
              %343 = sbr.rel (0) target = $region82
            $region81: #{equivariant_conv2d.1} parent=77 // pred_region
              loop: start=0, step=1, limit=1
              $region83: #{equivariant_conv2d.1} parent=81 // loop_pre_header
                _
              $region84: #{equivariant_conv2d.1} parent=81 // loop_header
                %s345 = sphi 0, %s349
                %p346 = scmp.ge.s32.totalorder %s345, 1
                %s350 = sphi %s333, %s333
                %s351 = sphi %s339, %s339
              $region85: #{equivariant_conv2d.1} parent=81 // loop_header_branch
                %348 = sbr.rel (%p346) target = $region89
              $region86: #{equivariant_conv2d.1} parent=81 // loop_body
                %v352 = vld [vmem:[%s350] sm:$0xff]
                %353 = vst [vmem:[%s351] sm:$0xff] %v352
                %v354 = vld [vmem:[%s350 + $0x8] sm:$0xff]
                %355 = vst [vmem:[%s351 + $0x8] sm:$0xff] %v354
                %v356 = vld [vmem:[%s350 + $0x10] sm:$0xff]
                %357 = vst [vmem:[%s351 + $0x20] sm:$0xff] %v356
                %v358 = vld [vmem:[%s350 + $0x18] sm:$0xff]
                %359 = vst [vmem:[%s351 + $0x28] sm:$0xff] %v358
              $region87: #{equivariant_conv2d.1} parent=81 // loop_footer
                %s349 = sadd.s32 1, %s345
              $region88: #{equivariant_conv2d.1} parent=81 // loop_footer_branch
                %344 = sbr.rel target = $region84
              $region89: #{equivariant_conv2d.1} parent=81 // loop_exit
                _
            $region82: #{equivariant_conv2d.1} parent=77 // pred_fallthru
              _
            // Predicated region
            $region90: #{equivariant_conv2d.1} parent=77 // pred_check
              _
            $region91: #{equivariant_conv2d.1} parent=77 // pred_check_branch
              %361 = sbr.rel target = $region93
            $region92: #{equivariant_conv2d.1} parent=77 // pred_region
              _
            $region93: #{equivariant_conv2d.1} parent=77 // pred_fallthru
              _
          $region78: #{equivariant_conv2d.1} parent=73 // pred_fallthru
            _
          %362 = vnop
        $region74: #{equivariant_conv2d.1} parent=65 // pred_fallthru
          _
      $region66: #{equivariant_conv2d.1} parent=5 // pred_fallthru
        _
      %p363 = scmp.le.s32.totalorder 2, %s9
      // Predicated region
      $region94: #{equivariant_conv2d.1} parent=5 // pred_check
        %p364 = pneg %p363
      $region95: #{equivariant_conv2d.1} parent=5 // pred_check_branch
        %366 = sbr.rel (%p364) target = $region97
      $region96: #{equivariant_conv2d.1} parent=5 // pred_region
        %s367 = ssub.s32 %s9, 2
        // Predicated region
        $region98: #{equivariant_conv2d.1} parent=96 // pred_check
          %p368 = pneg %p106
        $region99: #{equivariant_conv2d.1} parent=96 // pred_check_branch
          %370 = sbr.rel (%p368) target = $region101
        $region100: #{equivariant_conv2d.1} parent=96 // pred_region
          %s371 = sand.u32 %s91, 1
          %s372 = sand.u32 %s91, 1
          %s373 = smul.addr %s372, 32
          %s374 = scalar_lea.vmem [#allocation3], %s373
        $region101: #{equivariant_conv2d.1} parent=96 // pred_fallthru
          _
      $region97: #{equivariant_conv2d.1} parent=5 // pred_fallthru
        _
    $region6: #{equivariant_conv2d.1} parent=1 // loop_footer
      %s13 = sadd.s32 1, %s9
    $region7: #{equivariant_conv2d.1} parent=1 // loop_footer_branch
      %8 = sbr.rel target = $region3
    $region8: #{equivariant_conv2d.1} parent=1 // loop_exit
      _

</llo_original>
